<compile_context>
chip_gen: v7x
topology: tpu7x:2x2x1
jax: 0.10.0
libtpu: 0.0.40
codegen_flags: <defaults>
</compile_context>

<pallas_src>
import functools

import jax
import jax.numpy as jnp
from jax.experimental import pallas as pl
from jax.experimental.pallas import tpu as pltpu

KH = KW = 3  # kernel_size = 3, stride = 1, padding = 1, dilation = 1


def conv_bn_relu_kernel(x_ref, w_ref, shift_ref, mask_ref, o_ref, *, H, W):
    """One grid step = one image.

    x_ref:     (1, Cin, H*W)       flattened NCHW input (lanes = H*W)
    w_ref:     (Cout, KH*KW*Cin)   conv weights * BN scale, im2col layout
    shift_ref: (Cout, 1)           BN shift (= -running_mean * scale)
    mask_ref:  (KH*KW*Cin, H*W)    0/1 column-validity mask for the flat taps
    o_ref:     (1, Cout, H*W)      output (lanes = H*W)
    """
    Cin = x_ref.shape[1]
    HW = H * W

    # Fold the spatial zero padding into VMEM: pad the flattened image by
    # (W+1) zeros on both sides so every 3x3 tap is a contiguous lane slice.
    x0 = x_ref[0].astype(jnp.float32)                    # (Cin, HW)
    zpad = jnp.zeros((Cin, W + 1), jnp.float32)
    xf = jnp.concatenate([zpad, x0, zpad], axis=1)       # (Cin, HW + 2*W + 2)

    # im2col: stack the 9 lane-shifted slices along the contraction axis.
    pieces = []
    for kh in range(KH):
        for kw in range(KW):
            s = kh * W + kw                              # = (W+1) + (kh-1)*W + (kw-1)
            pieces.append(xf[:, s:s + HW])               # (Cin, HW)
    cols = jnp.concatenate(pieces, axis=0)               # (KH*KW*Cin, HW)
    cols = cols * mask_ref[...]                          # kill row-wrap columns

    # Single MXU matmul (BN scale already folded into w), then bias + ReLU.
    acc = jnp.dot(w_ref[...], cols, preferred_element_type=jnp.float32)  # (Cout, HW)
    y = acc + shift_ref[...]
    o_ref[0, :, :] = jnp.maximum(y, 0.0).astype(o_ref.dtype)


@functools.partial(jax.jit, static_argnames=("eps",))
def basic_layer(x_nchw, w_oihw, running_mean, running_var, eps=1e-5):
    """Forward pass of BasicLayer.

    x_nchw: (N, Cin, H, W) float32, w_oihw: (Cout, Cin, 3, 3) (PyTorch layout).
    """
    N, Cin, H, W = x_nchw.shape
    Cout = w_oihw.shape[0]
    HW = H * W
    K = KH * KW * Cin

    # Free, layout-preserving reshape: spatial goes on the lane axis.
    x_flat = x_nchw.reshape(N, Cin, HW)

    # Eval-mode BatchNorm (affine=False): fold scale into the conv weights,
    # keep the shift as a (Cout, 1) bias.
    scale = 1.0 / jnp.sqrt(running_var.astype(jnp.float32) + eps)           # (Cout,)
    shift = (-running_mean.astype(jnp.float32) * scale).reshape(Cout, 1)    # (Cout, 1)
    # im2col weight layout: column index = kh*KW*Cin + kw*Cin + c
    w_mat = jnp.transpose(w_oihw, (0, 2, 3, 1)).reshape(Cout, K)
    w_mat = (w_mat.astype(jnp.float32) * scale[:, None])

    # Column-validity mask for the flattened taps (zeroes w==0 for kw=0 and
    # w==W-1 for kw=2); row out-of-bounds taps already land in the zero pad.
    col = jnp.arange(HW, dtype=jnp.int32) % W
    tap_masks = []
    for kh in range(KH):
        for kw in range(KW):
            dw = kw - 1
            valid = jnp.logical_and(col + dw >= 0, col + dw < W)
            tap_masks.append(
                jnp.broadcast_to(valid.astype(jnp.float32)[None, :], (Cin, HW)))
    mask = jnp.concatenate(tap_masks, axis=0)                               # (K, HW)

    kernel = functools.partial(conv_bn_relu_kernel, H=H, W=W)
    out_flat = pl.pallas_call(
        kernel,
        out_shape=jax.ShapeDtypeStruct((N, Cout, HW), x_nchw.dtype),
        grid_spec=pltpu.PrefetchScalarGridSpec(
            num_scalar_prefetch=0,
            grid=(N,),
            in_specs=[
                pl.BlockSpec((1, Cin, HW), lambda n: (n, 0, 0)),
                pl.BlockSpec((Cout, K), lambda n: (0, 0)),
                pl.BlockSpec((Cout, 1), lambda n: (0, 0)),
                pl.BlockSpec((K, HW), lambda n: (0, 0)),
            ],
            out_specs=pl.BlockSpec((1, Cout, HW), lambda n: (n, 0, 0)),
        ),
        # NOTE: for large H*W*Cin, tile H*W along the grid and raise
        # vmem_limit_bytes (esp. on v7x's 64 MiB VMEM); unnecessary here.
        compiler_params=pltpu.CompilerParams(
            dimension_semantics=("parallel",),
        ),
    )(x_flat, w_mat, shift, mask)

    # Free reshape back to the PyTorch NCHW convention.
    return out_flat.reshape(N, Cout, H, W)


def _reference(x_nchw, w_oihw, running_mean, running_var, eps=1e-5):
    y = jax.lax.conv_general_dilated(
        x_nchw, w_oihw,
        window_strides=(1, 1),
        padding=((1, 1), (1, 1)),
        dimension_numbers=("NCHW", "OIHW", "NCHW"),
    )
    y = (y - running_mean[None, :, None, None]) / jnp.sqrt(
        running_var[None, :, None, None] + eps
    )
    return jnp.maximum(y, 0.0)


if __name__ == "__main__":
    # Small shapes consistent with the module: N=2, Cin=4, Cout=8, H=W=16.
    N, Cin, Cout, H, W = 2, 4, 8, 16, 16
    key = jax.random.PRNGKey(0)
    kx, kwt, km, kv = jax.random.split(key, 4)

    x = jax.random.normal(kx, (N, Cin, H, W), dtype=jnp.float32)

    # Deterministic parameter init (Conv2d kaiming-uniform-like bound).
    fan_in = Cin * KH * KW
    bound = 1.0 / (fan_in ** 0.5)
    w_oihw = jax.random.uniform(
        kwt, (Cout, Cin, KH, KW), minval=-bound, maxval=bound, dtype=jnp.float32
    )

    # BatchNorm2d(affine=False) running statistics (eval-mode semantics).
    running_mean = 0.1 * jax.random.normal(km, (Cout,), dtype=jnp.float32)
    running_var = jax.random.uniform(
        kv, (Cout,), minval=0.5, maxval=1.5, dtype=jnp.float32
    )

    out = basic_layer(x, w_oihw, running_mean, running_var)
    out = jax.block_until_ready(out)

    ref = _reference(x, w_oihw, running_mean, running_var)
    assert out.shape == (N, Cout, H, W), out.shape
    err = float(jnp.max(jnp.abs(out - ref)))
    assert err < 1e-4, err
    print("KERNEL_OK")
</pallas_src>

<mosaic_0001>
module attributes {stable_mosaic.version = 11 : i64} {
  func.func @conv_bn_relu_kernel(%arg0: i32, %arg1: memref<1x4x256xf32, #tpu.memory_space<vmem>>, %arg2: memref<8x36xf32, #tpu.memory_space<vmem>>, %arg3: memref<8x1xf32, #tpu.memory_space<vmem>>, %arg4: memref<36x256xf32, #tpu.memory_space<vmem>>, %arg5: memref<1x8x256xf32, #tpu.memory_space<vmem>>) attributes {dimension_semantics = [#tpu.dimension_semantics<parallel>], iteration_bounds = array<i64: 2>, scalar_prefetch = 0 : i64, scratch_operands = 0 : i64, tpu.core_type = #tpu.core_type<tc>, window_params = [{transform_indices = @transform_0, window_bounds = array<i64: 1, 4, 256>}, {pipeline_mode = #tpu.pipeline_mode<synchronous>, transform_indices = @transform_1, window_bounds = array<i64: 8, 36>}, {pipeline_mode = #tpu.pipeline_mode<synchronous>, transform_indices = @transform_2, window_bounds = array<i64: 8, 1>}, {pipeline_mode = #tpu.pipeline_mode<synchronous>, transform_indices = @transform_3, window_bounds = array<i64: 36, 256>}, {transform_indices = @transform_4, window_bounds = array<i64: 1, 8, 256>}]} {
    %c0 = arith.constant 0 : index
    %c0_0 = arith.constant 0 : index
    %c0_1 = arith.constant 0 : index
    %0 = vector.load %arg1[%c0, %c0_0, %c0_1] : memref<1x4x256xf32, #tpu.memory_space<vmem>>, vector<1x4x256xf32>
    %1 = vector.shape_cast %0 : vector<1x4x256xf32> to vector<4x256xf32>
    %cst = arith.constant 0.000000e+00 : f32
    %2 = vector.broadcast %cst : f32 to vector<4x17xf32>
    %3 = tpu.concatenate %2, %1, %2 in 1 : vector<4x17xf32>, vector<4x256xf32>, vector<4x17xf32> -> vector<4x290xf32>
    %4 = vector.extract_strided_slice %3 {offsets = [0, 0], sizes = [4, 256], strides = [1, 1]} : vector<4x290xf32> to vector<4x256xf32>
    %5 = vector.extract_strided_slice %3 {offsets = [0, 1], sizes = [4, 256], strides = [1, 1]} : vector<4x290xf32> to vector<4x256xf32>
    %6 = vector.extract_strided_slice %3 {offsets = [0, 2], sizes = [4, 256], strides = [1, 1]} : vector<4x290xf32> to vector<4x256xf32>
    %7 = vector.extract_strided_slice %3 {offsets = [0, 16], sizes = [4, 256], strides = [1, 1]} : vector<4x290xf32> to vector<4x256xf32>
    %8 = vector.extract_strided_slice %3 {offsets = [0, 17], sizes = [4, 256], strides = [1, 1]} : vector<4x290xf32> to vector<4x256xf32>
    %9 = vector.extract_strided_slice %3 {offsets = [0, 18], sizes = [4, 256], strides = [1, 1]} : vector<4x290xf32> to vector<4x256xf32>
    %10 = vector.extract_strided_slice %3 {offsets = [0, 32], sizes = [4, 256], strides = [1, 1]} : vector<4x290xf32> to vector<4x256xf32>
    %11 = vector.extract_strided_slice %3 {offsets = [0, 33], sizes = [4, 256], strides = [1, 1]} : vector<4x290xf32> to vector<4x256xf32>
    %12 = vector.extract_strided_slice %3 {offsets = [0, 34], sizes = [4, 256], strides = [1, 1]} : vector<4x290xf32> to vector<4x256xf32>
    %13 = tpu.concatenate %4, %5, %6, %7, %8, %9, %10, %11, %12 in 0 : vector<4x256xf32>, vector<4x256xf32>, vector<4x256xf32>, vector<4x256xf32>, vector<4x256xf32>, vector<4x256xf32>, vector<4x256xf32>, vector<4x256xf32>, vector<4x256xf32> -> vector<36x256xf32>
    %c0_2 = arith.constant 0 : index
    %c0_3 = arith.constant 0 : index
    %14 = vector.load %arg4[%c0_2, %c0_3] : memref<36x256xf32, #tpu.memory_space<vmem>>, vector<36x256xf32>
    %15 = arith.mulf %13, %14 : vector<36x256xf32>
    %c0_4 = arith.constant 0 : index
    %c0_5 = arith.constant 0 : index
    %16 = vector.load %arg2[%c0_4, %c0_5] : memref<8x36xf32, #tpu.memory_space<vmem>>, vector<8x36xf32>
    %cst_6 = arith.constant dense<0.000000e+00> : vector<8x256xf32>
    %17 = tpu.matmul %16, %15, %cst_6 {dimension_numbers = #tpu.dot_dimension_numbers<[1], [0], [0], [1], [0, 0, 1, 1], [], []>} : vector<8x36xf32>, vector<36x256xf32>, vector<8x256xf32> -> vector<8x256xf32>
    %c0_7 = arith.constant 0 : index
    %c0_8 = arith.constant 0 : index
    %18 = vector.load %arg3[%c0_7, %c0_8] : memref<8x1xf32, #tpu.memory_space<vmem>>, vector<8x1xf32>
    %19 = vector.broadcast %18 : vector<8x1xf32> to vector<8x256xf32>
    %20 = arith.addf %17, %19 : vector<8x256xf32>
    %cst_9 = arith.constant 0.000000e+00 : f32
    %21 = vector.broadcast %cst_9 : f32 to vector<8x256xf32>
    %22 = arith.maximumf %20, %21 : vector<8x256xf32>
    %c0_10 = arith.constant 0 : index
    %c0_11 = arith.constant 0 : index
    %c0_12 = arith.constant 0 : index
    %23 = vector.load %arg5[%c0_10, %c0_11, %c0_12] : memref<1x8x256xf32, #tpu.memory_space<vmem>>, vector<1x8x256xf32>
    %24 = vector.shape_cast %23 : vector<1x8x256xf32> to vector<8x256xf32>
    %25 = vector.shape_cast %22 : vector<8x256xf32> to vector<1x8x256xf32>
    tpu.vector_store %arg5[%c0_10, %c0_11, %c0_12], %25 {strides = array<i32>} : memref<1x8x256xf32, #tpu.memory_space<vmem>>, vector<1x8x256xf32>,
    return
  }
  func.func @transform_0(%arg0: i32) -> (i32, i32, i32) {
    %c0_i32 = arith.constant 0 : i32
    %c0_i32_0 = arith.constant 0 : i32
    %c0_i32_1 = arith.constant 0 : i32
    return %arg0, %c0_i32, %c0_i32_0 : i32, i32, i32
  }
  func.func @transform_1(%arg0: i32) -> (i32, i32) {
    %c0_i32 = arith.constant 0 : i32
    %c0_i32_0 = arith.constant 0 : i32
    %c0_i32_1 = arith.constant 0 : i32
    return %c0_i32, %c0_i32_0 : i32, i32
  }
  func.func @transform_2(%arg0: i32) -> (i32, i32) {
    %c0_i32 = arith.constant 0 : i32
    %c0_i32_0 = arith.constant 0 : i32
    %c0_i32_1 = arith.constant 0 : i32
    return %c0_i32, %c0_i32_0 : i32, i32
  }
  func.func @transform_3(%arg0: i32) -> (i32, i32) {
    %c0_i32 = arith.constant 0 : i32
    %c0_i32_0 = arith.constant 0 : i32
    %c0_i32_1 = arith.constant 0 : i32
    return %c0_i32, %c0_i32_0 : i32, i32
  }
  func.func @transform_4(%arg0: i32) -> (i32, i32, i32) {
    %c0_i32 = arith.constant 0 : i32
    %c0_i32_0 = arith.constant 0 : i32
    %c0_i32_1 = arith.constant 0 : i32
    return %arg0, %c0_i32, %c0_i32_0 : i32, i32, i32
  }
}

</mosaic_0001>

<llo_original>
// kernel: basic_layer.1
$region0: #{basic_layer.1}
  #allocation0 [shape = 'u32[]', space=smem, size = 0x4, offset = 0x4, fixed_abs, tag = 'smem constant byte address 0x4 - core index']
  #allocation1 [shape = 'u32[144,128]{1,0:T(1,128)}', space=vmem, size = 0x12000, scoped, tag = 'internal scratch']
  %s0 = inlined_call_operand.vmem [shape: f32[2,4,256], index: 0, kind: input, shape index: {}]
  %s1 = inlined_call_operand.vmem [shape: f32[8,36], index: 1, kind: input, shape index: {}]
  %s2 = inlined_call_operand.vmem [shape: f32[8,1], index: 2, kind: input, shape index: {}]
  %s3 = inlined_call_operand.vmem [shape: f32[36,256], index: 3, kind: input, shape index: {}]
  %s4 = inlined_call_operand.vmem [shape: f32[2,8,256], index: 4, kind: output, shape index: {}]
  %s5 = sld [smem:[#allocation0]]
  $region49: #{basic_layer.1} parent=0
    _
  %s7 = ssub.s32 1, %s5
  %s8 = scalar_select 0, %s7, %s5
  loop: start=0, step=1, limit=4
  $region2: #{basic_layer.1} parent=0 // loop_pre_header
    _
  $region3: #{basic_layer.1} parent=0 // loop_header
    %s10 = sphi 0, %s14
    %p11 = scmp.ge.s32.totalorder %s10, 4
    %s20 = sphi 0, %s22
    %s23 = sphi 0, %s20
    %s24 = sphi 0, %s23
    %s40 = sphi 0, %s24
    %s44 = sphi 0, %s44
    %s46 = sphi 0, %s44
    %s47 = sphi 0, %s46
    %s61 = sphi 0, %s47
    %s65 = sphi 0, %s65
    %s67 = sphi 0, %s65
    %s68 = sphi 0, %s67
    %s82 = sphi 0, %s68
    %s86 = sphi 0, %s86
    %s88 = sphi 0, %s86
    %s89 = sphi 0, %s88
    %s103 = sphi 0, %s89
    %s109 = sphi 0, %s111
    %s112 = sphi 0, %s109
    %s113 = sphi 0, %s112
    %s129 = sphi 0, %s113
  $region4: #{basic_layer.1} parent=0 // loop_header_branch
    %13 = sbr.rel (%p11) target = $region8
  $region5: #{basic_layer.1} parent=0 // loop_body
    %s15 = ssub.s32 %s10, 1
    %s16 = ssub.s32 %s10, 2
    %s17 = sadd.s32 %s10, 1
    %s18 = ssub.s32 %s10, %s17
    %p19 = scmp.eq.s32.totalorder %s18, 0
    %s21 = sadd.s32 %s20, 1
    %s22 = scalar_select %p19, %s20, %s21
    %p25 = pneg %p19
    %p26 = scmp.eq.s32.totalorder %s10, 1
    %p27 = por %p25, %p26
    %p28 = scmp.ne.s32.totalorder %s20, %s23
    %p29 = scmp.eq.s32.totalorder %s10, 0
    %p30 = por %p28, %p29
    %p31 = scmp.ne.s32.totalorder %s20, %s23
    %p32 = scmp.eq.s32.totalorder %s15, 1
    %p33 = por %p31, %p32
    %p34 = scmp.ne.s32.totalorder %s23, %s24
    %p35 = scmp.eq.s32.totalorder %s15, 0
    %p36 = por %p34, %p35
    %p37 = scmp.ne.s32.totalorder %s23, %s24
    %p38 = scmp.eq.s32.totalorder %s16, 1
    %p39 = por %p37, %p38
    %p41 = scmp.ne.s32.totalorder %s24, %s40
    %p42 = scmp.eq.s32.totalorder %s16, 0
    %p43 = por %p41, %p42
    %s45 = sadd.s32 %s44, 1
    %p48 = scmp.eq.s32.totalorder %s10, 1
    %p49 = scmp.ne.s32.totalorder %s44, %s46
    %p50 = scmp.eq.s32.totalorder %s10, 0
    %p51 = por %p49, %p50
    %p52 = scmp.ne.s32.totalorder %s44, %s46
    %p53 = scmp.eq.s32.totalorder %s15, 1
    %p54 = por %p52, %p53
    %p55 = scmp.ne.s32.totalorder %s46, %s47
    %p56 = scmp.eq.s32.totalorder %s15, 0
    %p57 = por %p55, %p56
    %p58 = scmp.ne.s32.totalorder %s46, %s47
    %p59 = scmp.eq.s32.totalorder %s16, 1
    %p60 = por %p58, %p59
    %p62 = scmp.ne.s32.totalorder %s47, %s61
    %p63 = scmp.eq.s32.totalorder %s16, 0
    %p64 = por %p62, %p63
    %s66 = sadd.s32 %s65, 1
    %p69 = scmp.eq.s32.totalorder %s10, 1
    %p70 = scmp.ne.s32.totalorder %s65, %s67
    %p71 = scmp.eq.s32.totalorder %s10, 0
    %p72 = por %p70, %p71
    %p73 = scmp.ne.s32.totalorder %s65, %s67
    %p74 = scmp.eq.s32.totalorder %s15, 1
    %p75 = por %p73, %p74
    %p76 = scmp.ne.s32.totalorder %s67, %s68
    %p77 = scmp.eq.s32.totalorder %s15, 0
    %p78 = por %p76, %p77
    %p79 = scmp.ne.s32.totalorder %s67, %s68
    %p80 = scmp.eq.s32.totalorder %s16, 1
    %p81 = por %p79, %p80
    %p83 = scmp.ne.s32.totalorder %s68, %s82
    %p84 = scmp.eq.s32.totalorder %s16, 0
    %p85 = por %p83, %p84
    %s87 = sadd.s32 %s86, 1
    %p90 = scmp.eq.s32.totalorder %s10, 1
    %p91 = scmp.ne.s32.totalorder %s86, %s88
    %p92 = scmp.eq.s32.totalorder %s10, 0
    %p93 = por %p91, %p92
    %p94 = scmp.ne.s32.totalorder %s86, %s88
    %p95 = scmp.eq.s32.totalorder %s15, 1
    %p96 = por %p94, %p95
    %p97 = scmp.ne.s32.totalorder %s88, %s89
    %p98 = scmp.eq.s32.totalorder %s15, 0
    %p99 = por %p97, %p98
    %p100 = scmp.ne.s32.totalorder %s88, %s89
    %p101 = scmp.eq.s32.totalorder %s16, 1
    %p102 = por %p100, %p101
    %p104 = scmp.ne.s32.totalorder %s89, %s103
    %p105 = scmp.eq.s32.totalorder %s16, 0
    %p106 = por %p104, %p105
    %s107 = ssub.s32 %s10, %s17
    %p108 = scmp.eq.s32.totalorder %s107, 0
    %s110 = sadd.s32 %s109, 1
    %s111 = scalar_select %p108, %s109, %s110
    %p114 = pneg %p108
    %p115 = scmp.eq.s32.totalorder %s10, 1
    %p116 = por %p114, %p115
    %p117 = scmp.ne.s32.totalorder %s109, %s112
    %p118 = scmp.eq.s32.totalorder %s10, 0
    %p119 = por %p117, %p118
    %p120 = scmp.ne.s32.totalorder %s109, %s112
    %p121 = scmp.eq.s32.totalorder %s15, 1
    %p122 = por %p120, %p121
    %p123 = scmp.ne.s32.totalorder %s112, %s113
    %p124 = scmp.eq.s32.totalorder %s15, 0
    %p125 = por %p123, %p124
    %p126 = scmp.ne.s32.totalorder %s112, %s113
    %p127 = scmp.eq.s32.totalorder %s16, 1
    %p128 = por %p126, %p127
    %p130 = scmp.ne.s32.totalorder %s113, %s129
    %p131 = scmp.eq.s32.totalorder %s16, 0
    %p132 = por %p130, %p131
    %p133 = scmp.le.s32.totalorder 1, %s10
    %p134 = scmp.lt.s32.totalorder %s10, 3
    %p135 = pnand %p133, %p134
    %p136 = pneg %p135
    // Predicated region
    $region9: #{basic_layer.1} parent=5 // pred_check
      _
    $region10: #{basic_layer.1} parent=5 // pred_check_branch
      %138 = sbr.rel (%p135) target = $region12
    $region11: #{basic_layer.1} parent=5 // pred_region
      %s139 = ssub.s32 %s10, 1
      // Predicated region
      $region13: #{basic_layer.1} parent=11 // pred_check
        %p140 = pneg %p57
      $region14: #{basic_layer.1} parent=11 // pred_check_branch
        %142 = sbr.rel (%p140) target = $region16
      $region15: #{basic_layer.1} parent=11 // pred_region
        _
      $region16: #{basic_layer.1} parent=11 // pred_fallthru
        _
      // Predicated region
      $region17: #{basic_layer.1} parent=11 // pred_check
        %p143 = pneg %p78
      $region18: #{basic_layer.1} parent=11 // pred_check_branch
        %145 = sbr.rel (%p143) target = $region20
      $region19: #{basic_layer.1} parent=11 // pred_region
        _
      $region20: #{basic_layer.1} parent=11 // pred_fallthru
        _
      // Predicated region
      $region21: #{basic_layer.1} parent=11 // pred_check
        %p146 = pneg %p99
      $region22: #{basic_layer.1} parent=11 // pred_check_branch
        %148 = sbr.rel (%p146) target = $region24
      $region23: #{basic_layer.1} parent=11 // pred_region
        _
      $region24: #{basic_layer.1} parent=11 // pred_fallthru
        _
    $region12: #{basic_layer.1} parent=5 // pred_fallthru
      _
    %p149 = scmp.lt.s32.totalorder %s10, 2
    // Predicated region
    $region25: #{basic_layer.1} parent=5 // pred_check
      %p150 = pneg %p149
    $region26: #{basic_layer.1} parent=5 // pred_check_branch
      %152 = sbr.rel (%p150) target = $region28
    $region27: #{basic_layer.1} parent=5 // pred_region
      // Predicated region
      $region29: #{basic_layer.1} parent=27 // pred_check
        %p153 = pneg %p30
      $region30: #{basic_layer.1} parent=27 // pred_check_branch
        %155 = sbr.rel (%p153) target = $region32
      $region31: #{basic_layer.1} parent=27 // pred_region
        %p156 = scmp.lt.s32.totalorder %s10, 1
        %s157 = scalar_select %p156, %s10, 1
        %s158 = smul.addr %s157, 2
        %s159 = smul.addr %s158, 4
        %s160 = scalar_lea.vmem %s0, %s159
      $region32: #{basic_layer.1} parent=27 // pred_fallthru
        _
    $region28: #{basic_layer.1} parent=5 // pred_fallthru
      _
    %p161 = scmp.le.s32.totalorder 1, %s10
    %p162 = scmp.lt.s32.totalorder %s10, 3
    %p163 = pnand %p161, %p162
    %p164 = pneg %p163
    // Predicated region
    $region33: #{basic_layer.1} parent=5 // pred_check
      _
    $region34: #{basic_layer.1} parent=5 // pred_check_branch
      %166 = sbr.rel (%p163) target = $region36
    $region35: #{basic_layer.1} parent=5 // pred_region
      %s167 = ssub.s32 %s10, 1
      %p168 = scmp.lt.s32.totalorder %s15, 1
      %s169 = scalar_select %p168, %s15, 1
      %s170 = smul.addr %s169, 2
      %s171 = smul.addr %s170, 4
      %s172 = scalar_lea.vmem %s0, %s171
      %p173 = pneg %p36
      %p174 = pneg %p33
      %p175 = pneg %p57
      %p176 = pneg %p54
      %p177 = pneg %p78
      %p178 = pneg %p75
      %p179 = pneg %p99
      %p180 = pneg %p96
      %p181 = pneg %p125
      %p182 = pneg %p122
      %p183 = scmp.lt.s32.totalorder %s15, 1
      %s184 = scalar_select %p183, %s15, 1
      %s185 = smul.addr %s184, 2
      %s186 = smul.addr %s185, 8
      %s187 = scalar_lea.vmem %s4, %s186
      %p188 = scmp.lt.s32.totalorder %s15, 1
      %s189 = scalar_select %p188, %s15, 1
      %s190 = smul.addr %s189, 2
      %s191 = smul.addr %s190, 4
      %s192 = scalar_lea.vmem %s0, %s191
      %p193 = scmp.lt.s32.totalorder %s15, 1
      %s194 = scalar_select %p193, %s15, 1
      %s195 = smul.addr %s194, 2
      %s196 = smul.addr %s195, 8
      %s197 = scalar_lea.vmem %s4, %s196
      %v198 = vld [vmem:[%s192] sm:$0xff]
      %v200 = vcombine.high %v198, %v198
      %201 = vrot.lane.b32.xlu0 %v198, 17
      %v202 = vpop.permute.xlu0 %201
      %203 = vrot.lane.b32.xlu0 %v200, 17
      %v204 = vpop.permute.xlu0 %203
      %vm205 = vcmask 138240
      %v206 = vsel %vm205, %v202, %v204
      %v210 = vsel %vm205, 0.0, %v202
      %v211 = vsel %vm205, %v204, 0.0
      %v214 = vrot.slane %v210, 4
      %v215 = vrot.slane %v206, 4
      %v216 = vrot.slane %v211, 4
      %217 = vrot.lane.b32.xlu0 %v214, 127
      %v218 = vpop.permute.xlu0 %217
      %219 = vrot.lane.b32.xlu0 %v215, 127
      %v220 = vpop.permute.xlu0 %219
      %221 = vrot.lane.b32.xlu0 %v216, 127
      %v222 = vpop.permute.xlu0 %221
      %vm223 = vcmask 1039360
      %v224 = vsel %vm223, %v218, %v220
      %v225 = vsel %vm223, %v220, %v222
      %228 = vrot.lane.b32.xlu0 %v210, 126
      %v229 = vpop.permute.xlu0 %228
      %230 = vrot.lane.b32.xlu0 %v206, 126
      %v231 = vpop.permute.xlu0 %230
      %232 = vrot.lane.b32.xlu0 %v211, 126
      %v233 = vpop.permute.xlu0 %232
      %vm234 = vcmask 1031168
      %v235 = vsel %vm234, %v229, %v231
      %v236 = vsel %vm234, %v231, %v233
      %239 = vrot.lane.b32.xlu0 %v214, 112
      %v240 = vpop.permute.xlu0 %239
      %241 = vrot.lane.b32.xlu0 %v215, 112
      %v242 = vpop.permute.xlu0 %241
      %243 = vrot.lane.b32.xlu0 %v216, 112
      %v244 = vpop.permute.xlu0 %243
      %vm245 = vcmask 916480
      %v246 = vsel %vm245, %v240, %v242
      %v247 = vsel %vm245, %v242, %v244
      %250 = vrot.lane.b32.xlu0 %v210, 111
      %v251 = vpop.permute.xlu0 %250
      %252 = vrot.lane.b32.xlu0 %v206, 111
      %v253 = vpop.permute.xlu0 %252
      %254 = vrot.lane.b32.xlu0 %v211, 111
      %v255 = vpop.permute.xlu0 %254
      %vm256 = vcmask 908288
      %v257 = vsel %vm256, %v251, %v253
      %v258 = vsel %vm256, %v253, %v255
      %261 = vrot.lane.b32.xlu0 %v214, 110
      %v262 = vpop.permute.xlu0 %261
      %263 = vrot.lane.b32.xlu0 %v215, 110
      %v264 = vpop.permute.xlu0 %263
      %265 = vrot.lane.b32.xlu0 %v216, 110
      %v266 = vpop.permute.xlu0 %265
      %vm267 = vcmask 900096
      %v268 = vsel %vm267, %v262, %v264
      %v269 = vsel %vm267, %v264, %v266
      %272 = vrot.lane.b32.xlu0 %v210, 96
      %v273 = vpop.permute.xlu0 %272
      %274 = vrot.lane.b32.xlu0 %v206, 96
      %v275 = vpop.permute.xlu0 %274
      %276 = vrot.lane.b32.xlu0 %v211, 96
      %v277 = vpop.permute.xlu0 %276
      %vm278 = vcmask 785408
      %v279 = vsel %vm278, %v273, %v275
      %v280 = vsel %vm278, %v275, %v277
      %283 = vrot.lane.b32.xlu0 %v214, 95
      %v284 = vpop.permute.xlu0 %283
      %285 = vrot.lane.b32.xlu0 %v215, 95
      %v286 = vpop.permute.xlu0 %285
      %287 = vrot.lane.b32.xlu0 %v216, 95
      %v288 = vpop.permute.xlu0 %287
      %vm289 = vcmask 777216
      %v290 = vsel %vm289, %v284, %v286
      %v291 = vsel %vm289, %v286, %v288
      %294 = vrot.lane.b32.xlu0 %v210, 94
      %v295 = vpop.permute.xlu0 %294
      %296 = vrot.lane.b32.xlu0 %v206, 94
      %v297 = vpop.permute.xlu0 %296
      %298 = vrot.lane.b32.xlu0 %v211, 94
      %v299 = vpop.permute.xlu0 %298
      %vm300 = vcmask 769024
      %v301 = vsel %vm300, %v295, %v297
      %v302 = vsel %vm300, %v297, %v299
      %vm305 = vcmask 1043456
      %v306 = vsel %vm305, %v210, %v224
      %v307 = vsel %vm305, %v206, %v225
      %v308 = vsel %vm305, %v235, %v246
      %v309 = vsel %vm305, %v236, %v247
      %v310 = vsel %vm305, %v257, %v268
      %v311 = vsel %vm305, %v258, %v269
      %v312 = vsel %vm305, %v279, %v290
      %v313 = vsel %vm305, %v280, %v291
      %v314 = vld [vmem:[%s3] sm:$0xff]
      %v315 = vld [vmem:[%s3 + $0x8] sm:$0xff]
      %v316 = vld [vmem:[%s3 + $0x10] sm:$0xff]
      %v317 = vld [vmem:[%s3 + $0x18] sm:$0xff]
      %v318 = vld [vmem:[%s3 + $0x20] sm:$0xff]
      %v319 = vld [vmem:[%s3 + $0x28] sm:$0xff]
      %v320 = vld [vmem:[%s3 + $0x30] sm:$0xff]
      %v321 = vld [vmem:[%s3 + $0x38] sm:$0xff]
      %v322 = vld [vmem:[%s3 + $0x40] sm:$0xf]
      %v323 = vld [vmem:[%s3 + $0x48] sm:$0xf]
      %v324 = vmul.f32 %v306, %v314
      %v325 = vmul.f32 %v307, %v315
      %v326 = vmul.f32 %v308, %v316
      %v327 = vmul.f32 %v309, %v317
      %v328 = vmul.f32 %v310, %v318
      %v329 = vmul.f32 %v311, %v319
      %v330 = vmul.f32 %v312, %v320
      %v331 = vmul.f32 %v313, %v321
      %v332 = vmul.f32 %v301, %v322
      %v333 = vmul.f32 %v302, %v323
      %v334 = vld [vmem:[%s1] sm:$0xff]
      %v335 = vld [vmem:[%s2] sm:$0xff]
      %337 = vset.pattern.permute.xlu0 0
      %338 = vperm.xlu0 %337, %v335
      %v339 = vpop.permute.xlu0 %338
      %vm341 = vcmask 293888
      %v343 = vsel %vm341, %v334, 0
      %v346 = vsel %vm305, %v332, 0
      %v349 = vsel %vm305, %v333, 0
      %351 = vmatprep.subr.mxu0 %v325
      %352 = vmatpush1.msra.mxu0 %v324
      %353 = vmatprep.subr.mxu0 %v327
      %354 = vmatpush1.msra.mxu0 %v326
      %355 = vmatprep.subr.mxu0 %v329
      %356 = vmatpush1.msra.mxu0 %v328
      %357 = vmatprep.subr.mxu0 %v331
      %358 = vmatpush1.msra.mxu0 %v330
      %359 = vmatprep.subr.mxu0 %v349
      %360 = vmatpush1.msra.mxu0 %v346
      %361 = vmatprep.subr.mxu0 0.0
      %362 = vmatpush1.msra.mxu0 0.0
      %363 = vmatprep.subr.mxu0 0.0
      %364 = vmatpush1.msra.mxu0 0.0
      %365 = vmatprep.subr.mxu0 0.0
      %366 = vmatpush1.msra.mxu0 0.0
      %367 = vmatprep.subr.mxu0 0.0
      %368 = vmatpush1.msra.mxu0 0.0
      %369 = vmatprep.subr.mxu0 0.0
      %370 = vmatpush1.msra.mxu0 0.0
      %371 = vmatprep.subr.mxu0 0.0
      %372 = vmatpush1.msra.mxu0 0.0
      %373 = vmatprep.subr.mxu0 0.0
      %374 = vmatpush1.msra.mxu0 0.0
      %375 = vmatprep.subr.mxu0 0.0
      %376 = vmatpush1.msra.mxu0 0.0
      %377 = vmatprep.subr.mxu0 0.0
      %378 = vmatpush1.msra.mxu0 0.0
      %379 = vmatprep.subr.mxu0 0.0
      %380 = vmatpush1.msra.mxu0 0.0
      %381 = vmatprep.subr.mxu0 0.0
      %382 = vmatpush1.msra.mxu0 0.0
      %383 = vmatprep.subr.mxu0 0.0
      %384 = vmatpush1.msra.mxu0 0.0
      %385 = vmatprep.subr.mxu0 0.0
      %386 = vmatpush1.msra.mxu0 0.0
      %387 = vmatprep.subr.mxu0 0.0
      %388 = vmatpush1.msra.mxu0 0.0
      %389 = vmatprep.subr.mxu0 0.0
      %390 = vmatpush1.msra.mxu0 0.0
      %391 = vmatprep.subr.mxu0 0.0
      %392 = vmatpush1.msra.mxu0 0.0
      %393 = vmatprep.subr.mxu0 0.0
      %394 = vmatpush1.msra.mxu0 0.0
      %395 = vmatprep.subr.mxu0 0.0
      %396 = vmatpush1.msra.mxu0 0.0
      %397 = vmatprep.subr.mxu0 0.0
      %398 = vmatpush1.msra.mxu0 0.0
      %399 = vmatprep.subr.mxu0 0.0
      %400 = vmatpush1.msra.mxu0 0.0
      %401 = vmatprep.subr.mxu0 0.0
      %402 = vmatpush1.msra.mxu0 0.0
      %403 = vmatprep.subr.mxu0 0.0
      %404 = vmatpush1.msra.mxu0 0.0
      %405 = vmatprep.subr.mxu0 0.0
      %406 = vmatpush1.msra.mxu0 0.0
      %407 = vmatprep.subr.mxu0 0.0
      %408 = vmatpush1.msra.mxu0 0.0
      %409 = vmatprep.subr.mxu0 0.0
      %410 = vmatpush1.msra.mxu0 0.0
      %411 = vmatprep.subr.mxu0 0.0
      %412 = vmatpush1.msra.mxu0 0.0
      %413 = vmatprep.subr.mxu0 0.0
      %414 = vmatpush1.msra.mxu0 0.0
      %415 = vmatprep.mubr.f32.mxu0 0.0
      %416 = vmatmul.mubr.f32.gmra.mrb[0].mxu0 %v343
      %v417 = vpop.f32.mrb[0].mxu0
      %v418 = vadd.f32 %v339, %v417
      %v419 = vpop.f32.mrb[0].mxu0
      %v420 = vadd.f32 %v339, %v419
      %421 = vdwg.mxu0
      %v422 = vmax.f32 %v418, 0.0
      %v423 = vmax.f32 %v420, 0.0
      %424 = vst [vmem:[%s197] sm:$0xff] %v422
      %425 = vst [vmem:[%s197 + $0x8] sm:$0xff] %v423
      %p426 = scmp.lt.s32.totalorder %s15, 1
      %s427 = scalar_select %p426, %s15, 1
      %s428 = smul.addr %s427, 2
      %s429 = smul.addr %s428, 8
      %s430 = scalar_lea.vmem %s4, %s429
      // Predicated region
      $region37: #{basic_layer.1} parent=35 // pred_check
        %p431 = pneg %p122
      $region38: #{basic_layer.1} parent=35 // pred_check_branch
        %433 = sbr.rel (%p431) target = $region40
      $region39: #{basic_layer.1} parent=35 // pred_region
        _
      $region40: #{basic_layer.1} parent=35 // pred_fallthru
        _
    $region36: #{basic_layer.1} parent=5 // pred_fallthru
      _
    %p434 = scmp.le.s32.totalorder 2, %s10
    // Predicated region
    $region41: #{basic_layer.1} parent=5 // pred_check
      %p435 = pneg %p434
    $region42: #{basic_layer.1} parent=5 // pred_check_branch
      %437 = sbr.rel (%p435) target = $region44
    $region43: #{basic_layer.1} parent=5 // pred_region
      %s438 = ssub.s32 %s10, 2
      // Predicated region
      $region45: #{basic_layer.1} parent=43 // pred_check
        %p439 = pneg %p128
      $region46: #{basic_layer.1} parent=43 // pred_check_branch
        %441 = sbr.rel (%p439) target = $region48
      $region47: #{basic_layer.1} parent=43 // pred_region
        %p442 = scmp.lt.s32.totalorder %s16, 1
        %s443 = scalar_select %p442, %s16, 1
        %s444 = smul.addr %s443, 2
        %s445 = smul.addr %s444, 8
        %s446 = scalar_lea.vmem %s4, %s445
      $region48: #{basic_layer.1} parent=43 // pred_fallthru
        _
    $region44: #{basic_layer.1} parent=5 // pred_fallthru
      _
  $region6: #{basic_layer.1} parent=0 // loop_footer
    %s14 = sadd.s32 1, %s10
  $region7: #{basic_layer.1} parent=0 // loop_footer_branch
    %9 = sbr.rel target = $region3
  $region8: #{basic_layer.1} parent=0 // loop_exit
    _

</llo_original>
